<compile_context>
chip_gen: v7x
topology: tpu7x:2x2x1
jax: 0.10.0
libtpu: 0.0.40
codegen_flags: <defaults>
</compile_context>

<pallas_src>
import functools

import jax
import jax.numpy as jnp
from jax import lax
from jax.experimental import pallas as pl
from jax.experimental.pallas import tpu as pltpu

_MIB = 1024 * 1024


# ------------------------------ kernels --------------------------------------

def _ffn_resident_kernel(x_ref, w1_ref, b1_ref, w2_ref, b2_ref, g_ref, beta_ref,
                         o_ref, *, eps, mxu_dtype, f_chunk):
    """Weights fully resident in VMEM; F chunked in-kernel via static slices."""
    F = w1_ref.shape[1]
    x_f32 = x_ref[...].astype(jnp.float32)
    xb = x_ref[...].astype(mxu_dtype)            # cast once per row tile

    # residual + output bias folded into the accumulator up-front
    acc = x_f32 + b2_ref[...]
    for s in range(0, F, f_chunk):               # static, lane-aligned slices
        h = jnp.dot(xb, w1_ref[:, s:s + f_chunk],
                    preferred_element_type=jnp.float32)
        h = jnp.maximum(h + b1_ref[:, s:s + f_chunk], 0.0)
        acc = acc + jnp.dot(h.astype(mxu_dtype), w2_ref[s:s + f_chunk, :],
                            preferred_element_type=jnp.float32)

    # LayerNorm (biased variance, matching torch.nn.LayerNorm), f32 throughout
    mean = jnp.mean(acc, axis=-1, keepdims=True)
    var = jnp.mean((acc - mean) * (acc - mean), axis=-1, keepdims=True)
    out = (acc - mean) * lax.rsqrt(var + eps) * g_ref[...] + beta_ref[...]
    o_ref[...] = out.astype(o_ref.dtype)


def _ffn_streaming_kernel(x_ref, w1_ref, b1_ref, w2_ref, b2_ref, g_ref, beta_ref,
                          o_ref, acc_ref, xb_ref, *, eps, mxu_dtype):
    """Weights streamed in F chunks along the (arbitrary) k grid axis."""
    k = pl.program_id(1)
    nk = pl.num_programs(1)

    @pl.when(k == 0)
    def _():
        # cast the activation tile to the MXU dtype once per row tile
        xb_ref[...] = x_ref[...].astype(mxu_dtype)

    h = jnp.dot(xb_ref[...], w1_ref[...], preferred_element_type=jnp.float32)
    h = jnp.maximum(h + b1_ref[...], 0.0)
    partial = jnp.dot(h.astype(mxu_dtype), w2_ref[...],
                      preferred_element_type=jnp.float32)

    @pl.when(k == 0)
    def _():
        # write the first partial directly; residual + output bias folded in
        acc_ref[...] = x_ref[...].astype(jnp.float32) + b2_ref[...] + partial

    @pl.when(k > 0)
    def _():
        acc_ref[...] += partial

    @pl.when(k == nk - 1)
    def _():
        r = acc_ref[...]
        mean = jnp.mean(r, axis=-1, keepdims=True)
        var = jnp.mean((r - mean) * (r - mean), axis=-1, keepdims=True)
        out = (r - mean) * lax.rsqrt(var + eps) * g_ref[...] + beta_ref[...]
        o_ref[...] = out.astype(o_ref.dtype)


# --------------------------- sizing helpers -----------------------------------

def _vmem_capacity_bytes(default=64 * _MIB):
    try:
        info = pltpu.get_tpu_info()
        cap = getattr(info, "vmem_capacity_bytes", None)
        if cap:
            return int(cap)
    except Exception:
        pass
    return default


def _pick_f_chunk(F, f_tile):
    """Largest chunk <= f_tile that divides F and is a multiple of 128 (else F)."""
    f_tile = min(f_tile, F)
    if f_tile >= F:
        return F
    d = (f_tile // 128) * 128
    while d >= 128:
        if F % d == 0:
            return d
        d -= 128
    return F


def _resident_vmem_est(row_tile, D, F, f_chunk, in_bytes, out_bytes):
    w = 2 * 2 * (D * F * 2)                           # w1+w2 bf16, double-buffered
    io = 2 * row_tile * D * (in_bytes + out_bytes)    # x + out blocks, double-buffered
    tmp = row_tile * f_chunk * 6                      # h (f32) + bf16 copy
    tmp += row_tile * D * (4 + 2)                     # acc f32 + bf16 x
    small = 2 * 4 * (F + 3 * D)
    return w + io + tmp + small


def _streaming_vmem_est(row_tile, D, F, f_chunk, in_bytes, out_bytes):
    w = 2 * 2 * (D * f_chunk * 2)                     # per-chunk w1/w2, double-buffered
    io = 2 * row_tile * D * (in_bytes + out_bytes)
    scratch = row_tile * D * (4 + 2)                  # acc f32 + xb bf16 scratch
    tmp = row_tile * f_chunk * 6
    small = 2 * 4 * (f_chunk + 3 * D)
    return w + io + scratch + tmp + small


def _shrink_to_fit(est, row_tile, f_chunk, F, budget):
    while est(row_tile, f_chunk) > budget:
        if f_chunk > 128:
            nf = _pick_f_chunk(F, max(128, f_chunk // 2))
            if nf < f_chunk:
                f_chunk = nf
                continue
        if row_tile > 8:
            row_tile = max(8, ((row_tile // 2) // 8) * 8)
            continue
        break
    return row_tile, f_chunk


# ------------------------------ wrapper ---------------------------------------

def ffn_layer(tgt, w1, b1, w2, b2, gamma, beta, *, eps=1e-5,
              row_tile=None, f_tile=2048, mxu_dtype=jnp.bfloat16,
              vmem_limit_bytes=None, weight_resident=None):
    """Fused FFN + residual + LayerNorm.

    tgt:   (S, B, D)
    w1:    (D, F)     b1: (F,)
    w2:    (F, D)     b2: (D,)
    gamma: (D,)       beta: (D,)
    """
    S, B, D = tgt.shape
    F = w1.shape[1]
    N = S * B
    x2d = tgt.reshape(N, D)
    in_bytes = x2d.dtype.itemsize
    out_bytes = in_bytes

    # ---- VMEM budget: physical per-core capacity minus headroom (v7x = 64 MiB) ----
    cap = _vmem_capacity_bytes()
    if vmem_limit_bytes is None:
        vmem_limit_bytes = max(32 * _MIB, cap - 16 * _MIB)
    vmem_limit_bytes = int(min(vmem_limit_bytes, cap))
    budget = int(0.8 * vmem_limit_bytes)

    # ---- row tiling: big row tiles so weight traffic amortizes (MXU-bound) ----
    if row_tile is None:
        row_tile = 1024 if vmem_limit_bytes >= 96 * _MIB else 512
    n_rows8 = pl.cdiv(N, 8) * 8
    row_tile = max(8, min((row_tile // 8) * 8, n_rows8))
    # keep >= 2 row tiles when possible so both TensorCores get work (v7x)
    if pl.cdiv(N, row_tile) < 2 and n_rows8 >= 16:
        row_tile = max(8, pl.cdiv(pl.cdiv(N, 2), 8) * 8)

    f_chunk = _pick_f_chunk(F, f_tile)

    # ---- path selection: hold the full bf16 weights resident when they fit ----
    if weight_resident is None:
        weight_resident = (
            _resident_vmem_est(row_tile, D, F, f_chunk, in_bytes, out_bytes) <= budget)

    # ---- small params in f32, weights cast once to the MXU dtype ----
    # TODO(synk): optional fp8 weight storage (+ per-channel scales) for v7x if
    # the streaming path remains HBM-bound and numerics allow it.
    w1c = w1.astype(mxu_dtype)
    w2c = w2.astype(mxu_dtype)
    b1_2d = b1.reshape(1, F).astype(jnp.float32)
    b2_2d = b2.reshape(1, D).astype(jnp.float32)
    g_2d = gamma.reshape(1, D).astype(jnp.float32)
    beta_2d = beta.reshape(1, D).astype(jnp.float32)

    if weight_resident:
        est = lambda rt, fc: _resident_vmem_est(rt, D, F, fc, in_bytes, out_bytes)
        row_tile, f_chunk = _shrink_to_fit(est, row_tile, f_chunk, F, budget)
        n_row_tiles = pl.cdiv(N, row_tile)
        kernel = functools.partial(_ffn_resident_kernel, eps=eps,
                                   mxu_dtype=mxu_dtype, f_chunk=f_chunk)
        grid_spec = pltpu.PrefetchScalarGridSpec(
            num_scalar_prefetch=0,
            grid=(n_row_tiles,),
            in_specs=[
                pl.BlockSpec((row_tile, D), lambda i: (i, 0)),   # x rows
                pl.BlockSpec((D, F), lambda i: (0, 0)),          # w1 (fetched once)
                pl.BlockSpec((1, F), lambda i: (0, 0)),          # b1
                pl.BlockSpec((F, D), lambda i: (0, 0)),          # w2 (fetched once)
                pl.BlockSpec((1, D), lambda i: (0, 0)),          # b2
                pl.BlockSpec((1, D), lambda i: (0, 0)),          # gamma
                pl.BlockSpec((1, D), lambda i: (0, 0)),          # beta
            ],
            out_specs=pl.BlockSpec((row_tile, D), lambda i: (i, 0)),
        )
        dim_sem = ("parallel",)
    else:
        est = lambda rt, fc: _streaming_vmem_est(rt, D, F, fc, in_bytes, out_bytes)
        row_tile, f_chunk = _shrink_to_fit(est, row_tile, f_chunk, F, budget)
        n_row_tiles = pl.cdiv(N, row_tile)
        kernel = functools.partial(_ffn_streaming_kernel, eps=eps, mxu_dtype=mxu_dtype)
        grid_spec = pltpu.PrefetchScalarGridSpec(
            num_scalar_prefetch=0,
            grid=(n_row_tiles, F // f_chunk),
            in_specs=[
                pl.BlockSpec((row_tile, D), lambda i, k: (i, 0)),  # x (resident over k)
                pl.BlockSpec((D, f_chunk), lambda i, k: (0, k)),   # w1 chunk
                pl.BlockSpec((1, f_chunk), lambda i, k: (0, k)),   # b1 chunk
                pl.BlockSpec((f_chunk, D), lambda i, k: (k, 0)),   # w2 chunk
                pl.BlockSpec((1, D), lambda i, k: (0, 0)),         # b2
                pl.BlockSpec((1, D), lambda i, k: (0, 0)),         # gamma
                pl.BlockSpec((1, D), lambda i, k: (0, 0)),         # beta
            ],
            out_specs=pl.BlockSpec((row_tile, D), lambda i, k: (i, 0)),
            scratch_shapes=[pltpu.VMEM((row_tile, D), jnp.float32),
                            pltpu.VMEM((row_tile, D), mxu_dtype)],
        )
        dim_sem = ("parallel", "arbitrary")

    out2d = pl.pallas_call(
        kernel,
        out_shape=jax.ShapeDtypeStruct((N, D), tgt.dtype),
        grid_spec=grid_spec,
        compiler_params=pltpu.CompilerParams(
            dimension_semantics=dim_sem,
            vmem_limit_bytes=int(vmem_limit_bytes)),
    )(x2d, w1c, b1_2d, w2c, b2_2d, g_2d, beta_2d)

    return out2d.reshape(S, B, D)


# ----------------------- deterministic parameter init -------------------------

def _xavier_uniform(key, fan_in, fan_out, dtype=jnp.float32):
    limit = (6.0 / (fan_in + fan_out)) ** 0.5
    return jax.random.uniform(key, (fan_in, fan_out), dtype, -limit, limit)


def init_ffn_params(key, d_model, dim_feedforward, dtype=jnp.float32):
    k1, k2, k3, k4 = jax.random.split(key, 4)
    w1 = _xavier_uniform(k1, d_model, dim_feedforward, dtype)      # linear1.weight.T
    w2 = _xavier_uniform(k2, dim_feedforward, d_model, dtype)      # linear2.weight.T
    # biases keep nn.Linear default init (uniform +- 1/sqrt(fan_in))
    b1 = jax.random.uniform(k3, (dim_feedforward,), dtype,
                            -1.0 / d_model ** 0.5, 1.0 / d_model ** 0.5)
    b2 = jax.random.uniform(k4, (d_model,), dtype,
                            -1.0 / dim_feedforward ** 0.5, 1.0 / dim_feedforward ** 0.5)
    gamma = jnp.ones((d_model,), dtype)
    beta = jnp.zeros((d_model,), dtype)
    return w1, b1, w2, b2, gamma, beta


# --------------------------------- references ----------------------------------

def _layer_norm(r, gamma, beta, eps):
    mean = jnp.mean(r, axis=-1, keepdims=True)
    var = jnp.mean((r - mean) ** 2, axis=-1, keepdims=True)
    return (r - mean) / jnp.sqrt(var + eps) * gamma + beta


def _reference_f32(tgt, w1, b1, w2, b2, gamma, beta, eps=1e-5):
    h = jnp.maximum(tgt @ w1 + b1, 0.0)
    y = h @ w2 + b2
    return _layer_norm(tgt + y, gamma, beta, eps)


def _reference_mixed(tgt, w1, b1, w2, b2, gamma, beta, eps=1e-5):
    # Same mixed-precision recipe as the kernel: bf16 matmul operands,
    # f32 accumulation, f32 residual + LayerNorm.
    xb = tgt.astype(jnp.bfloat16)
    h = jnp.einsum("sbd,df->sbf", xb, w1.astype(jnp.bfloat16),
                   preferred_element_type=jnp.float32) + b1
    h = jnp.maximum(h, 0.0)
    y = jnp.einsum("sbf,fd->sbd", h.astype(jnp.bfloat16), w2.astype(jnp.bfloat16),
                   preferred_element_type=jnp.float32) + b2
    return _layer_norm(tgt.astype(jnp.float32) + y, gamma, beta, eps)


# ------------------------------------ demo --------------------------------------

if __name__ == "__main__":
    key = jax.random.PRNGKey(0)
    d_model = 32
    dim_feedforward = 64
    seq, batch = 8, 2

    kx, kp = jax.random.split(key)
    tgt = jax.random.normal(kx, (seq, batch, d_model), jnp.float32)
    params = init_ffn_params(kp, d_model, dim_feedforward)

    ref_mixed = _reference_mixed(tgt, *params)
    ref_f32 = _reference_f32(tgt, *params)

    # Exercise both the weight-resident path and the F-streaming fallback.
    for resident in (True, False):
        out = ffn_layer(tgt, *params, weight_resident=resident)
        out = jax.block_until_ready(out)
        assert out.shape == (seq, batch, d_model)

        # Tight check against a pure-JAX mixed-precision reference.
        assert jnp.allclose(out, ref_mixed, atol=1e-3, rtol=1e-3), \
            f"mismatch vs mixed-precision reference (resident={resident})"
        # Loose check against the full-f32 PyTorch-semantics reference.
        assert jnp.allclose(out, ref_f32, atol=3e-2, rtol=3e-2), \
            f"mismatch vs f32 reference (resident={resident})"

    print("KERNEL_OK")
</pallas_src>

<mosaic_0001>
module attributes {stable_mosaic.version = 11 : i64} {
  func.func @_ffn_resident_kernel(%arg0: i32, %arg1: memref<8x32xf32, #tpu.memory_space<vmem>>, %arg2: memref<32x64xbf16, #tpu.memory_space<vmem>>, %arg3: memref<1x64xf32, #tpu.memory_space<vmem>>, %arg4: memref<64x32xbf16, #tpu.memory_space<vmem>>, %arg5: memref<1x32xf32, #tpu.memory_space<vmem>>, %arg6: memref<1x32xf32, #tpu.memory_space<vmem>>, %arg7: memref<1x32xf32, #tpu.memory_space<vmem>>, %arg8: memref<8x32xf32, #tpu.memory_space<vmem>>) attributes {dimension_semantics = [#tpu.dimension_semantics<parallel>], iteration_bounds = array<i64: 2>, scalar_prefetch = 0 : i64, scratch_operands = 0 : i64, tpu.core_type = #tpu.core_type<tc>, window_params = [{transform_indices = @transform_0, window_bounds = array<i64: 8, 32>}, {pipeline_mode = #tpu.pipeline_mode<synchronous>, transform_indices = @transform_1, window_bounds = array<i64: 32, 64>}, {pipeline_mode = #tpu.pipeline_mode<synchronous>, transform_indices = @transform_2, window_bounds = array<i64: 1, 64>}, {pipeline_mode = #tpu.pipeline_mode<synchronous>, transform_indices = @transform_3, window_bounds = array<i64: 64, 32>}, {pipeline_mode = #tpu.pipeline_mode<synchronous>, transform_indices = @transform_4, window_bounds = array<i64: 1, 32>}, {pipeline_mode = #tpu.pipeline_mode<synchronous>, transform_indices = @transform_5, window_bounds = array<i64: 1, 32>}, {pipeline_mode = #tpu.pipeline_mode<synchronous>, transform_indices = @transform_6, window_bounds = array<i64: 1, 32>}, {transform_indices = @transform_7, window_bounds = array<i64: 8, 32>}]} {
    %c0 = arith.constant 0 : index
    %c0_0 = arith.constant 0 : index
    %0 = vector.load %arg1[%c0, %c0_0] : memref<8x32xf32, #tpu.memory_space<vmem>>, vector<8x32xf32>
    %c0_1 = arith.constant 0 : index
    %c0_2 = arith.constant 0 : index
    %1 = vector.load %arg1[%c0_1, %c0_2] : memref<8x32xf32, #tpu.memory_space<vmem>>, vector<8x32xf32>
    %2 = arith.truncf %1 : vector<8x32xf32> to vector<8x32xbf16>
    %c0_3 = arith.constant 0 : index
    %c0_4 = arith.constant 0 : index
    %3 = vector.load %arg5[%c0_3, %c0_4] : memref<1x32xf32, #tpu.memory_space<vmem>>, vector<1x32xf32>
    %4 = vector.broadcast %3 : vector<1x32xf32> to vector<8x32xf32>
    %5 = arith.addf %0, %4 : vector<8x32xf32>
    %c0_5 = arith.constant 0 : index
    %c0_6 = arith.constant 0 : index
    %6 = vector.load %arg2[%c0_5, %c0_6] : memref<32x64xbf16, #tpu.memory_space<vmem>>, vector<32x64xbf16>
    %cst = arith.constant dense<0.000000e+00> : vector<8x64xf32>
    %7 = tpu.matmul %2, %6, %cst {dimension_numbers = #tpu.dot_dimension_numbers<[1], [0], [0], [1], [0, 0, 1, 1], [], []>} : vector<8x32xbf16>, vector<32x64xbf16>, vector<8x64xf32> -> vector<8x64xf32>
    %c0_7 = arith.constant 0 : index
    %c0_8 = arith.constant 0 : index
    %8 = vector.load %arg3[%c0_7, %c0_8] : memref<1x64xf32, #tpu.memory_space<vmem>>, vector<1x64xf32>
    %9 = vector.broadcast %8 : vector<1x64xf32> to vector<8x64xf32>
    %10 = arith.addf %7, %9 : vector<8x64xf32>
    %cst_9 = arith.constant 0.000000e+00 : f32
    %11 = vector.broadcast %cst_9 : f32 to vector<8x64xf32>
    %12 = arith.maximumf %10, %11 : vector<8x64xf32>
    %13 = arith.truncf %12 : vector<8x64xf32> to vector<8x64xbf16>
    %c0_10 = arith.constant 0 : index
    %c0_11 = arith.constant 0 : index
    %14 = vector.load %arg4[%c0_10, %c0_11] : memref<64x32xbf16, #tpu.memory_space<vmem>>, vector<64x32xbf16>
    %cst_12 = arith.constant dense<0.000000e+00> : vector<8x32xf32>
    %15 = tpu.matmul %13, %14, %cst_12 {dimension_numbers = #tpu.dot_dimension_numbers<[1], [0], [0], [1], [0, 0, 1, 1], [], []>} : vector<8x64xbf16>, vector<64x32xbf16>, vector<8x32xf32> -> vector<8x32xf32>
    %16 = arith.addf %5, %15 : vector<8x32xf32>
    %cst_13 = arith.constant dense<0.000000e+00> : vector<8xf32>
    %17 = vector.multi_reduction <add>, %16, %cst_13 [1] : vector<8x32xf32> to vector<8xf32>
    %18 = vector.shape_cast %17 : vector<8xf32> to vector<8x1xf32>
    %cst_14 = arith.constant 3.200000e+01 : f32
    %19 = vector.broadcast %cst_14 : f32 to vector<8x1xf32>
    %20 = arith.divf %18, %19 : vector<8x1xf32>
    %21 = vector.broadcast %20 : vector<8x1xf32> to vector<8x32xf32>
    %22 = arith.subf %16, %21 : vector<8x32xf32>
    %23 = vector.broadcast %20 : vector<8x1xf32> to vector<8x32xf32>
    %24 = arith.subf %16, %23 : vector<8x32xf32>
    %25 = arith.mulf %22, %24 : vector<8x32xf32>
    %cst_15 = arith.constant dense<0.000000e+00> : vector<8xf32>
    %26 = vector.multi_reduction <add>, %25, %cst_15 [1] : vector<8x32xf32> to vector<8xf32>
    %27 = vector.shape_cast %26 : vector<8xf32> to vector<8x1xf32>
    %cst_16 = arith.constant 3.200000e+01 : f32
    %28 = vector.broadcast %cst_16 : f32 to vector<8x1xf32>
    %29 = arith.divf %27, %28 : vector<8x1xf32>
    %30 = vector.broadcast %20 : vector<8x1xf32> to vector<8x32xf32>
    %31 = arith.subf %16, %30 : vector<8x32xf32>
    %cst_17 = arith.constant 9.99999974E-6 : f32
    %32 = vector.broadcast %cst_17 : f32 to vector<8x1xf32>
    %33 = arith.addf %29, %32 : vector<8x1xf32>
    %34 = math.rsqrt %33 : vector<8x1xf32>
    %35 = vector.broadcast %34 : vector<8x1xf32> to vector<8x32xf32>
    %36 = arith.mulf %31, %35 : vector<8x32xf32>
    %c0_18 = arith.constant 0 : index
    %c0_19 = arith.constant 0 : index
    %37 = vector.load %arg6[%c0_18, %c0_19] : memref<1x32xf32, #tpu.memory_space<vmem>>, vector<1x32xf32>
    %38 = vector.broadcast %37 : vector<1x32xf32> to vector<8x32xf32>
    %39 = arith.mulf %36, %38 : vector<8x32xf32>
    %c0_20 = arith.constant 0 : index
    %c0_21 = arith.constant 0 : index
    %40 = vector.load %arg7[%c0_20, %c0_21] : memref<1x32xf32, #tpu.memory_space<vmem>>, vector<1x32xf32>
    %41 = vector.broadcast %40 : vector<1x32xf32> to vector<8x32xf32>
    %42 = arith.addf %39, %41 : vector<8x32xf32>
    %c0_22 = arith.constant 0 : index
    %c0_23 = arith.constant 0 : index
    %43 = vector.load %arg8[%c0_22, %c0_23] : memref<8x32xf32, #tpu.memory_space<vmem>>, vector<8x32xf32>
    tpu.vector_store %arg8[%c0_22, %c0_23], %42 {strides = array<i32>} : memref<8x32xf32, #tpu.memory_space<vmem>>, vector<8x32xf32>,
    return
  }
  func.func @transform_0(%arg0: i32) -> (i32, i32) {
    %c0_i32 = arith.constant 0 : i32
    %c0_i32_0 = arith.constant 0 : i32
    return %arg0, %c0_i32 : i32, i32
  }
  func.func @transform_1(%arg0: i32) -> (i32, i32) {
    %c0_i32 = arith.constant 0 : i32
    %c0_i32_0 = arith.constant 0 : i32
    %c0_i32_1 = arith.constant 0 : i32
    return %c0_i32, %c0_i32_0 : i32, i32
  }
  func.func @transform_2(%arg0: i32) -> (i32, i32) {
    %c0_i32 = arith.constant 0 : i32
    %c0_i32_0 = arith.constant 0 : i32
    %c0_i32_1 = arith.constant 0 : i32
    return %c0_i32, %c0_i32_0 : i32, i32
  }
  func.func @transform_3(%arg0: i32) -> (i32, i32) {
    %c0_i32 = arith.constant 0 : i32
    %c0_i32_0 = arith.constant 0 : i32
    %c0_i32_1 = arith.constant 0 : i32
    return %c0_i32, %c0_i32_0 : i32, i32
  }
  func.func @transform_4(%arg0: i32) -> (i32, i32) {
    %c0_i32 = arith.constant 0 : i32
    %c0_i32_0 = arith.constant 0 : i32
    %c0_i32_1 = arith.constant 0 : i32
    return %c0_i32, %c0_i32_0 : i32, i32
  }
  func.func @transform_5(%arg0: i32) -> (i32, i32) {
    %c0_i32 = arith.constant 0 : i32
    %c0_i32_0 = arith.constant 0 : i32
    %c0_i32_1 = arith.constant 0 : i32
    return %c0_i32, %c0_i32_0 : i32, i32
  }
  func.func @transform_6(%arg0: i32) -> (i32, i32) {
    %c0_i32 = arith.constant 0 : i32
    %c0_i32_0 = arith.constant 0 : i32
    %c0_i32_1 = arith.constant 0 : i32
    return %c0_i32, %c0_i32_0 : i32, i32
  }
  func.func @transform_7(%arg0: i32) -> (i32, i32) {
    %c0_i32 = arith.constant 0 : i32
    %c0_i32_0 = arith.constant 0 : i32
    return %arg0, %c0_i32 : i32, i32
  }
}

</mosaic_0001>

<llo_original>
// kernel: tpu_custom_call.1
$region0: #{tpu_custom_call.1}
  #allocation0 [shape = 'u32[]', space=smem, size = 0x4, offset = 0x4, fixed_abs, tag = 'smem constant byte address 0x4 - core index']
  #allocation1 [shape = 'u32[144,128]{1,0:T(1,128)}', space=vmem, size = 0x12000, scoped, tag = 'internal scratch']
  %s0 = inlined_call_operand.vmem [shape: f32[16,32], index: 0, kind: input, shape index: {}]
  %s1 = inlined_call_operand.vmem [shape: bf16[32,64], index: 1, kind: input, shape index: {}]
  %s2 = inlined_call_operand.vmem [shape: f32[1,64], index: 2, kind: input, shape index: {}]
  %s3 = inlined_call_operand.vmem [shape: bf16[64,32], index: 3, kind: input, shape index: {}]
  %s4 = inlined_call_operand.vmem [shape: f32[1,32], index: 4, kind: input, shape index: {}]
  %s5 = inlined_call_operand.vmem [shape: f32[1,32], index: 5, kind: input, shape index: {}]
  %s6 = inlined_call_operand.vmem [shape: f32[1,32], index: 6, kind: input, shape index: {}]
  %s7 = inlined_call_operand.hbm [shape: f32[16,32], index: 7, kind: output, shape index: {}]
  %s8 = sld [smem:[#allocation0]]
  $region61: #{tpu_custom_call.1} parent=0
    _
  %s10 = ssub.s32 1, %s8
  %s11 = scalar_select 0, %s10, %s8
  $region1: #{tpu_custom_call.1} parent=0
    #allocation2 [shape = 'u8[8192]{0}', space=vmem, size = 0x2000, scoped, tag = 'output window, operand 0']
    #allocation3 [shape = 's32[2]{0}', space=sflag, size = 0x8, scoped, tag = 'scoped memory for tpu_custom_call.1']
    %12 = vsyncpa [#allocation3], 0
    %s13 = scalar_lea.sflag [#allocation3], 1
    %14 = vsyncpa %s13, 0
    loop: start=0, step=1, limit=4
    $region2: #{tpu_custom_call.1} parent=1 // loop_pre_header
      _
    $region3: #{tpu_custom_call.1} parent=1 // loop_header
      %s16 = sphi 0, %s20
      %p17 = scmp.ge.s32.totalorder %s16, 4
      %s26 = sphi 0, %s28
      %s29 = sphi 0, %s26
      %s30 = sphi 0, %s29
      %s46 = sphi 0, %s30
      %s50 = sphi 0, %s50
      %s52 = sphi 0, %s50
      %s53 = sphi 0, %s52
      %s67 = sphi 0, %s53
      %s71 = sphi 0, %s71
      %s73 = sphi 0, %s71
      %s74 = sphi 0, %s73
      %s88 = sphi 0, %s74
      %s92 = sphi 0, %s92
      %s94 = sphi 0, %s92
      %s95 = sphi 0, %s94
      %s109 = sphi 0, %s95
      %s113 = sphi 0, %s113
      %s115 = sphi 0, %s113
      %s116 = sphi 0, %s115
      %s130 = sphi 0, %s116
      %s134 = sphi 0, %s134
      %s136 = sphi 0, %s134
      %s137 = sphi 0, %s136
      %s151 = sphi 0, %s137
      %s155 = sphi 0, %s155
      %s157 = sphi 0, %s155
      %s158 = sphi 0, %s157
      %s172 = sphi 0, %s158
      %s178 = sphi 0, %s180
      %s181 = sphi 0, %s178
      %s182 = sphi 0, %s181
      %s198 = sphi 0, %s182
    $region4: #{tpu_custom_call.1} parent=1 // loop_header_branch
      %19 = sbr.rel (%p17) target = $region8
    $region5: #{tpu_custom_call.1} parent=1 // loop_body
      %s21 = ssub.s32 %s16, 1
      %s22 = ssub.s32 %s16, 2
      %s23 = sadd.s32 %s16, 1
      %s24 = ssub.s32 %s16, %s23
      %p25 = scmp.eq.s32.totalorder %s24, 0
      %s27 = sadd.s32 %s26, 1
      %s28 = scalar_select %p25, %s26, %s27
      %p31 = pneg %p25
      %p32 = scmp.eq.s32.totalorder %s16, 1
      %p33 = por %p31, %p32
      %p34 = scmp.ne.s32.totalorder %s26, %s29
      %p35 = scmp.eq.s32.totalorder %s16, 0
      %p36 = por %p34, %p35
      %p37 = scmp.ne.s32.totalorder %s26, %s29
      %p38 = scmp.eq.s32.totalorder %s21, 1
      %p39 = por %p37, %p38
      %p40 = scmp.ne.s32.totalorder %s29, %s30
      %p41 = scmp.eq.s32.totalorder %s21, 0
      %p42 = por %p40, %p41
      %p43 = scmp.ne.s32.totalorder %s29, %s30
      %p44 = scmp.eq.s32.totalorder %s22, 1
      %p45 = por %p43, %p44
      %p47 = scmp.ne.s32.totalorder %s30, %s46
      %p48 = scmp.eq.s32.totalorder %s22, 0
      %p49 = por %p47, %p48
      %s51 = sadd.s32 %s50, 1
      %p54 = scmp.eq.s32.totalorder %s16, 1
      %p55 = scmp.ne.s32.totalorder %s50, %s52
      %p56 = scmp.eq.s32.totalorder %s16, 0
      %p57 = por %p55, %p56
      %p58 = scmp.ne.s32.totalorder %s50, %s52
      %p59 = scmp.eq.s32.totalorder %s21, 1
      %p60 = por %p58, %p59
      %p61 = scmp.ne.s32.totalorder %s52, %s53
      %p62 = scmp.eq.s32.totalorder %s21, 0
      %p63 = por %p61, %p62
      %p64 = scmp.ne.s32.totalorder %s52, %s53
      %p65 = scmp.eq.s32.totalorder %s22, 1
      %p66 = por %p64, %p65
      %p68 = scmp.ne.s32.totalorder %s53, %s67
      %p69 = scmp.eq.s32.totalorder %s22, 0
      %p70 = por %p68, %p69
      %s72 = sadd.s32 %s71, 1
      %p75 = scmp.eq.s32.totalorder %s16, 1
      %p76 = scmp.ne.s32.totalorder %s71, %s73
      %p77 = scmp.eq.s32.totalorder %s16, 0
      %p78 = por %p76, %p77
      %p79 = scmp.ne.s32.totalorder %s71, %s73
      %p80 = scmp.eq.s32.totalorder %s21, 1
      %p81 = por %p79, %p80
      %p82 = scmp.ne.s32.totalorder %s73, %s74
      %p83 = scmp.eq.s32.totalorder %s21, 0
      %p84 = por %p82, %p83
      %p85 = scmp.ne.s32.totalorder %s73, %s74
      %p86 = scmp.eq.s32.totalorder %s22, 1
      %p87 = por %p85, %p86
      %p89 = scmp.ne.s32.totalorder %s74, %s88
      %p90 = scmp.eq.s32.totalorder %s22, 0
      %p91 = por %p89, %p90
      %s93 = sadd.s32 %s92, 1
      %p96 = scmp.eq.s32.totalorder %s16, 1
      %p97 = scmp.ne.s32.totalorder %s92, %s94
      %p98 = scmp.eq.s32.totalorder %s16, 0
      %p99 = por %p97, %p98
      %p100 = scmp.ne.s32.totalorder %s92, %s94
      %p101 = scmp.eq.s32.totalorder %s21, 1
      %p102 = por %p100, %p101
      %p103 = scmp.ne.s32.totalorder %s94, %s95
      %p104 = scmp.eq.s32.totalorder %s21, 0
      %p105 = por %p103, %p104
      %p106 = scmp.ne.s32.totalorder %s94, %s95
      %p107 = scmp.eq.s32.totalorder %s22, 1
      %p108 = por %p106, %p107
      %p110 = scmp.ne.s32.totalorder %s95, %s109
      %p111 = scmp.eq.s32.totalorder %s22, 0
      %p112 = por %p110, %p111
      %s114 = sadd.s32 %s113, 1
      %p117 = scmp.eq.s32.totalorder %s16, 1
      %p118 = scmp.ne.s32.totalorder %s113, %s115
      %p119 = scmp.eq.s32.totalorder %s16, 0
      %p120 = por %p118, %p119
      %p121 = scmp.ne.s32.totalorder %s113, %s115
      %p122 = scmp.eq.s32.totalorder %s21, 1
      %p123 = por %p121, %p122
      %p124 = scmp.ne.s32.totalorder %s115, %s116
      %p125 = scmp.eq.s32.totalorder %s21, 0
      %p126 = por %p124, %p125
      %p127 = scmp.ne.s32.totalorder %s115, %s116
      %p128 = scmp.eq.s32.totalorder %s22, 1
      %p129 = por %p127, %p128
      %p131 = scmp.ne.s32.totalorder %s116, %s130
      %p132 = scmp.eq.s32.totalorder %s22, 0
      %p133 = por %p131, %p132
      %s135 = sadd.s32 %s134, 1
      %p138 = scmp.eq.s32.totalorder %s16, 1
      %p139 = scmp.ne.s32.totalorder %s134, %s136
      %p140 = scmp.eq.s32.totalorder %s16, 0
      %p141 = por %p139, %p140
      %p142 = scmp.ne.s32.totalorder %s134, %s136
      %p143 = scmp.eq.s32.totalorder %s21, 1
      %p144 = por %p142, %p143
      %p145 = scmp.ne.s32.totalorder %s136, %s137
      %p146 = scmp.eq.s32.totalorder %s21, 0
      %p147 = por %p145, %p146
      %p148 = scmp.ne.s32.totalorder %s136, %s137
      %p149 = scmp.eq.s32.totalorder %s22, 1
      %p150 = por %p148, %p149
      %p152 = scmp.ne.s32.totalorder %s137, %s151
      %p153 = scmp.eq.s32.totalorder %s22, 0
      %p154 = por %p152, %p153
      %s156 = sadd.s32 %s155, 1
      %p159 = scmp.eq.s32.totalorder %s16, 1
      %p160 = scmp.ne.s32.totalorder %s155, %s157
      %p161 = scmp.eq.s32.totalorder %s16, 0
      %p162 = por %p160, %p161
      %p163 = scmp.ne.s32.totalorder %s155, %s157
      %p164 = scmp.eq.s32.totalorder %s21, 1
      %p165 = por %p163, %p164
      %p166 = scmp.ne.s32.totalorder %s157, %s158
      %p167 = scmp.eq.s32.totalorder %s21, 0
      %p168 = por %p166, %p167
      %p169 = scmp.ne.s32.totalorder %s157, %s158
      %p170 = scmp.eq.s32.totalorder %s22, 1
      %p171 = por %p169, %p170
      %p173 = scmp.ne.s32.totalorder %s158, %s172
      %p174 = scmp.eq.s32.totalorder %s22, 0
      %p175 = por %p173, %p174
      %s176 = ssub.s32 %s16, %s23
      %p177 = scmp.eq.s32.totalorder %s176, 0
      %s179 = sadd.s32 %s178, 1
      %s180 = scalar_select %p177, %s178, %s179
      %p183 = pneg %p177
      %p184 = scmp.eq.s32.totalorder %s16, 1
      %p185 = por %p183, %p184
      %p186 = scmp.ne.s32.totalorder %s178, %s181
      %p187 = scmp.eq.s32.totalorder %s16, 0
      %p188 = por %p186, %p187
      %p189 = scmp.ne.s32.totalorder %s178, %s181
      %p190 = scmp.eq.s32.totalorder %s21, 1
      %p191 = por %p189, %p190
      %p192 = scmp.ne.s32.totalorder %s181, %s182
      %p193 = scmp.eq.s32.totalorder %s21, 0
      %p194 = por %p192, %p193
      %p195 = scmp.ne.s32.totalorder %s181, %s182
      %p196 = scmp.eq.s32.totalorder %s22, 1
      %p197 = por %p195, %p196
      %p199 = scmp.ne.s32.totalorder %s182, %s198
      %p200 = scmp.eq.s32.totalorder %s22, 0
      %p201 = por %p199, %p200
      %p202 = scmp.le.s32.totalorder 1, %s16
      %p203 = scmp.lt.s32.totalorder %s16, 3
      %p204 = pnand %p202, %p203
      %p205 = pneg %p204
      // Predicated region
      $region9: #{tpu_custom_call.1} parent=5 // pred_check
        _
      $region10: #{tpu_custom_call.1} parent=5 // pred_check_branch
        %207 = sbr.rel (%p204) target = $region12
      $region11: #{tpu_custom_call.1} parent=5 // pred_region
        %s208 = ssub.s32 %s16, 1
        // Predicated region
        $region13: #{tpu_custom_call.1} parent=11 // pred_check
          %p209 = pneg %p63
        $region14: #{tpu_custom_call.1} parent=11 // pred_check_branch
          %211 = sbr.rel (%p209) target = $region16
        $region15: #{tpu_custom_call.1} parent=11 // pred_region
          _
        $region16: #{tpu_custom_call.1} parent=11 // pred_fallthru
          _
        // Predicated region
        $region17: #{tpu_custom_call.1} parent=11 // pred_check
          %p212 = pneg %p84
        $region18: #{tpu_custom_call.1} parent=11 // pred_check_branch
          %214 = sbr.rel (%p212) target = $region20
        $region19: #{tpu_custom_call.1} parent=11 // pred_region
          _
        $region20: #{tpu_custom_call.1} parent=11 // pred_fallthru
          _
        // Predicated region
        $region21: #{tpu_custom_call.1} parent=11 // pred_check
          %p215 = pneg %p105
        $region22: #{tpu_custom_call.1} parent=11 // pred_check_branch
          %217 = sbr.rel (%p215) target = $region24
        $region23: #{tpu_custom_call.1} parent=11 // pred_region
          _
        $region24: #{tpu_custom_call.1} parent=11 // pred_fallthru
          _
        // Predicated region
        $region25: #{tpu_custom_call.1} parent=11 // pred_check
          %p218 = pneg %p126
        $region26: #{tpu_custom_call.1} parent=11 // pred_check_branch
          %220 = sbr.rel (%p218) target = $region28
        $region27: #{tpu_custom_call.1} parent=11 // pred_region
          _
        $region28: #{tpu_custom_call.1} parent=11 // pred_fallthru
          _
        // Predicated region
        $region29: #{tpu_custom_call.1} parent=11 // pred_check
          %p221 = pneg %p147
        $region30: #{tpu_custom_call.1} parent=11 // pred_check_branch
          %223 = sbr.rel (%p221) target = $region32
        $region31: #{tpu_custom_call.1} parent=11 // pred_region
          _
        $region32: #{tpu_custom_call.1} parent=11 // pred_fallthru
          _
        // Predicated region
        $region33: #{tpu_custom_call.1} parent=11 // pred_check
          %p224 = pneg %p168
        $region34: #{tpu_custom_call.1} parent=11 // pred_check_branch
          %226 = sbr.rel (%p224) target = $region36
        $region35: #{tpu_custom_call.1} parent=11 // pred_region
          _
        $region36: #{tpu_custom_call.1} parent=11 // pred_fallthru
          _
      $region12: #{tpu_custom_call.1} parent=5 // pred_fallthru
        _
      %p227 = scmp.lt.s32.totalorder %s16, 2
      // Predicated region
      $region37: #{tpu_custom_call.1} parent=5 // pred_check
        %p228 = pneg %p227
      $region38: #{tpu_custom_call.1} parent=5 // pred_check_branch
        %230 = sbr.rel (%p228) target = $region40
      $region39: #{tpu_custom_call.1} parent=5 // pred_region
        // Predicated region
        $region41: #{tpu_custom_call.1} parent=39 // pred_check
          %p231 = pneg %p36
        $region42: #{tpu_custom_call.1} parent=39 // pred_check_branch
          %233 = sbr.rel (%p231) target = $region44
        $region43: #{tpu_custom_call.1} parent=39 // pred_region
          %p234 = scmp.lt.s32.totalorder %s16, 1
          %s235 = scalar_select %p234, %s16, 1
          %s236 = smul.addr %s235, 8
          %s237 = scalar_lea.vmem %s0, %s236
        $region44: #{tpu_custom_call.1} parent=39 // pred_fallthru
          _
      $region40: #{tpu_custom_call.1} parent=5 // pred_fallthru
        _
      %p238 = scmp.le.s32.totalorder 1, %s16
      %p239 = scmp.lt.s32.totalorder %s16, 3
      %p240 = pnand %p238, %p239
      %p241 = pneg %p240
      // Predicated region
      $region45: #{tpu_custom_call.1} parent=5 // pred_check
        _
      $region46: #{tpu_custom_call.1} parent=5 // pred_check_branch
        %243 = sbr.rel (%p240) target = $region48
      $region47: #{tpu_custom_call.1} parent=5 // pred_region
        %s244 = ssub.s32 %s16, 1
        %p245 = scmp.lt.s32.totalorder %s21, 1
        %s246 = scalar_select %p245, %s21, 1
        %s247 = smul.addr %s246, 8
        %s248 = scalar_lea.vmem %s0, %s247
        %p249 = pneg %p42
        %p250 = pneg %p39
        %p251 = pneg %p63
        %p252 = pneg %p60
        %p253 = pneg %p84
        %p254 = pneg %p81
        %p255 = pneg %p105
        %p256 = pneg %p102
        %p257 = pneg %p126
        %p258 = pneg %p123
        %p259 = pneg %p147
        %p260 = pneg %p144
        %p261 = pneg %p168
        %p262 = pneg %p165
        %p263 = pneg %p194
        %p264 = pneg %p191
        %s265 = sand.u32 %s181, 1
        %s266 = scalar_lea.sflag [#allocation3], %s265
        %s267 = sand.u32 %s181, 1
        %s268 = smul.addr %s267, 8
        %s269 = scalar_lea.vmem [#allocation2], %s268
        %p270 = scmp.lt.s32.totalorder %s21, 1
        %s271 = scalar_select %p270, %s21, 1
        %s272 = smul.addr %s271, 8
        %s273 = scalar_lea.vmem %s0, %s272
        %v275 = vld [vmem:[%s273] sm:$0xff]
        %v276 = vpack.c.bf16 %v275, %v275
        %v277 = vld [vmem:[%s4] sm:$0x1]
        %v279 = vlaneseq
        %v280 = vshrl.u32 %v279, 7
        %v281 = vsub.s32 0, %v280
        %v282 = vrot.slane %v277, %v281
        %v284 = vadd.f32 %v275, %v282
        %v285 = vld [vmem:[%s1] sm:$0xf]
        %v286 = vld [vmem:[%s1 + $0x4] sm:$0xf]
        %v287 = vld [vmem:[%s1 + $0x8] sm:$0xf]
        %v288 = vld [vmem:[%s1 + $0xc] sm:$0xf]
        %v289 = vld [vmem:[%s2] sm:$0x1]
        %v291 = vlaneseq
        %v292 = vshrl.u32 %v291, 7
        %v293 = vsub.s32 0, %v292
        %v294 = vrot.slane %v289, %v293
        %v300 = vunpack.c.l.b16 %v285
        %v301 = vunpack.c.l.b16 %v286
        %v302 = vunpack.c.l.b16 %v287
        %v303 = vunpack.c.l.b16 %v288
        %v304 = vpack.c.b16 %v301, %v300
        %v305 = vpack.c.b16 %v303, %v302
        %vm308 = vcmask 261120
        %v310 = vsel %vm308, %v276, 0
        %312 = vmatprep.subr.bf16.mxu0 0
        %313 = vmatpush1.bf16.msra.mxu0 %v304
        %314 = vmatprep.subr.bf16.mxu0 0
        %315 = vmatpush1.bf16.msra.mxu0 %v305
        %316 = vmatprep.subr.bf16.mxu0 0
        %317 = vmatpush1.bf16.msra.mxu0 0
        %318 = vmatprep.subr.bf16.mxu0 0
        %319 = vmatpush1.bf16.msra.mxu0 0
        %320 = vmatprep.subr.bf16.mxu0 0
        %321 = vmatpush1.bf16.msra.mxu0 0
        %322 = vmatprep.subr.bf16.mxu0 0
        %323 = vmatpush1.bf16.msra.mxu0 0
        %324 = vmatprep.subr.bf16.mxu0 0
        %325 = vmatpush1.bf16.msra.mxu0 0
        %326 = vmatprep.subr.bf16.mxu0 0
        %327 = vmatpush1.bf16.msra.mxu0 0
        %328 = vmatprep.subr.bf16.mxu0 0
        %329 = vmatpush1.bf16.msra.mxu0 0
        %330 = vmatprep.subr.bf16.mxu0 0
        %331 = vmatpush1.bf16.msra.mxu0 0
        %332 = vmatprep.subr.bf16.mxu0 0
        %333 = vmatpush1.bf16.msra.mxu0 0
        %334 = vmatprep.subr.bf16.mxu0 0
        %335 = vmatpush1.bf16.msra.mxu0 0
        %336 = vmatprep.subr.bf16.mxu0 0
        %337 = vmatpush1.bf16.msra.mxu0 0
        %338 = vmatprep.subr.bf16.mxu0 0
        %339 = vmatpush1.bf16.msra.mxu0 0
        %340 = vmatprep.subr.bf16.mxu0 0
        %341 = vmatpush1.bf16.msra.mxu0 0
        %342 = vmatprep.subr.bf16.mxu0 0
        %343 = vmatpush1.bf16.msra.mxu0 0
        %344 = vmatprep.mubr.bf16.mxu0 0
        %345 = vmatmul.mubr.bf16.gmra.mrb[0].mxu0 %v310
        %v346 = vpop.f32.mrb[0].mxu0
        %v347 = vadd.f32 %v294, %v346
        %v348 = vpop.f32.mrb[0].mxu0
        %v349 = vpop.f32.mrb[0].mxu0
        %v350 = vpop.f32.mrb[0].mxu0
        %351 = vdwg.mxu0
        %v352 = vmax.f32 %v347, 0.0
        %v353 = vpack.c.bf16 %v352, %v352
        %v354 = vld [vmem:[%s3] sm:$0xf]
        %v355 = vld [vmem:[%s3 + $0x4] sm:$0xf]
        %v356 = vld [vmem:[%s3 + $0x8] sm:$0xf]
        %v357 = vld [vmem:[%s3 + $0xc] sm:$0xf]
        %v358 = vld [vmem:[%s3 + $0x10] sm:$0xf]
        %v359 = vld [vmem:[%s3 + $0x14] sm:$0xf]
        %v360 = vld [vmem:[%s3 + $0x18] sm:$0xf]
        %v361 = vld [vmem:[%s3 + $0x1c] sm:$0xf]
        %v370 = vunpack.c.l.b16 %v354
        %v371 = vunpack.c.l.b16 %v355
        %v372 = vunpack.c.l.b16 %v356
        %v373 = vunpack.c.l.b16 %v357
        %v374 = vunpack.c.l.b16 %v358
        %v375 = vunpack.c.l.b16 %v359
        %v376 = vunpack.c.l.b16 %v360
        %v377 = vunpack.c.l.b16 %v361
        %v378 = vpack.c.b16 %v371, %v370
        %v379 = vpack.c.b16 %v373, %v372
        %v380 = vpack.c.b16 %v375, %v374
        %v381 = vpack.c.b16 %v377, %v376
        %vm386 = vcmask 523264
        %v388 = vsel %vm386, %v353, 0
        %390 = vmatprep.subr.bf16.mxu0 0
        %391 = vmatpush1.bf16.msra.mxu0 %v378
        %392 = vmatprep.subr.bf16.mxu0 0
        %393 = vmatpush1.bf16.msra.mxu0 %v379
        %394 = vmatprep.subr.bf16.mxu0 0
        %395 = vmatpush1.bf16.msra.mxu0 %v380
        %396 = vmatprep.subr.bf16.mxu0 0
        %397 = vmatpush1.bf16.msra.mxu0 %v381
        %398 = vmatprep.subr.bf16.mxu0 0
        %399 = vmatpush1.bf16.msra.mxu0 0
        %400 = vmatprep.subr.bf16.mxu0 0
        %401 = vmatpush1.bf16.msra.mxu0 0
        %402 = vmatprep.subr.bf16.mxu0 0
        %403 = vmatpush1.bf16.msra.mxu0 0
        %404 = vmatprep.subr.bf16.mxu0 0
        %405 = vmatpush1.bf16.msra.mxu0 0
        %406 = vmatprep.subr.bf16.mxu0 0
        %407 = vmatpush1.bf16.msra.mxu0 0
        %408 = vmatprep.subr.bf16.mxu0 0
        %409 = vmatpush1.bf16.msra.mxu0 0
        %410 = vmatprep.subr.bf16.mxu0 0
        %411 = vmatpush1.bf16.msra.mxu0 0
        %412 = vmatprep.subr.bf16.mxu0 0
        %413 = vmatpush1.bf16.msra.mxu0 0
        %414 = vmatprep.subr.bf16.mxu0 0
        %415 = vmatpush1.bf16.msra.mxu0 0
        %416 = vmatprep.subr.bf16.mxu0 0
        %417 = vmatpush1.bf16.msra.mxu0 0
        %418 = vmatprep.subr.bf16.mxu0 0
        %419 = vmatpush1.bf16.msra.mxu0 0
        %420 = vmatprep.subr.bf16.mxu0 0
        %421 = vmatpush1.bf16.msra.mxu0 0
        %422 = vmatprep.mubr.bf16.mxu0 0
        %423 = vmatmul.mubr.bf16.gmra.mrb[0].mxu0 %v388
        %v424 = vpop.f32.mrb[0].mxu0
        %v425 = vadd.f32 0.0, %v424
        %v426 = vpop.f32.mrb[0].mxu0
        %v427 = vpop.f32.mrb[0].mxu0
        %v428 = vpop.f32.mrb[0].mxu0
        %429 = vdwg.mxu0
        %v430 = vadd.f32 %v284, %v425
        %v431 = vsel %vm308, %v430, 0.0
        %432 = vadd.xlane.f32.xlu0 %v431
        %v433 = vpop.xlane.xlu0 %432
        %v434 = vrcp.pop 32.0
        %v435 = vmul.f32 %v433, %v434
        %v436 = vsub.f32 %v430, %v435
        %v437 = vmul.f32 %v436, %v436
        %v438 = vsel %vm308, %v437, 0.0
        %439 = vadd.xlane.f32.xlu0 %v438
        %v440 = vpop.xlane.xlu0 %439
        %v441 = vmul.f32 %v440, %v434
        %v442 = vadd.f32 %v441, 1e-05
        %v443 = vrsqrt.pop %v442
        %v444 = vmul.f32 %v436, %v443
        %v445 = vld [vmem:[%s5] sm:$0x1]
        %v447 = vlaneseq
        %v448 = vshrl.u32 %v447, 7
        %v449 = vsub.s32 0, %v448
        %v450 = vrot.slane %v445, %v449
        %v452 = vmul.f32 %v444, %v450
        %v453 = vld [vmem:[%s6] sm:$0x1]
        %v455 = vlaneseq
        %v456 = vshrl.u32 %v455, 7
        %v457 = vsub.s32 0, %v456
        %v458 = vrot.slane %v453, %v457
        %v460 = vadd.f32 %v452, %v458
        %461 = vst.msk [vmem:[%s269] sm:$0xff] %vm308, %v460
        %s462 = sand.u32 %s181, 1
        %s463 = scalar_lea.sflag [#allocation3], %s462
        %s464 = sand.u32 %s181, 1
        %s465 = smul.addr %s464, 8
        %s466 = scalar_lea.vmem [#allocation2], %s465
        // Predicated region
        $region49: #{tpu_custom_call.1} parent=47 // pred_check
          %p467 = pneg %p191
        $region50: #{tpu_custom_call.1} parent=47 // pred_check_branch
          %469 = sbr.rel (%p467) target = $region52
        $region51: #{tpu_custom_call.1} parent=47 // pred_region
          %s471 = ssub.s32 128, 128
          %472 = vsyncadd %s463, %s471
          %s473 = smul.addr %s21, 128
          %s474 = scalar_lea.hbm %s7, %s473
          %s476 = sshll.u32 %s466, 4
          %s477 = int_to_ptr.vmem [resolvable:$true] %s476
          %479 = dma.vmem_to_hbm [thread:$0]  %s477, 128, %s474, %s463
        $region52: #{tpu_custom_call.1} parent=47 // pred_fallthru
          _
      $region48: #{tpu_custom_call.1} parent=5 // pred_fallthru
        _
      %p480 = scmp.le.s32.totalorder 2, %s16
      // Predicated region
      $region53: #{tpu_custom_call.1} parent=5 // pred_check
        %p481 = pneg %p480
      $region54: #{tpu_custom_call.1} parent=5 // pred_check_branch
        %483 = sbr.rel (%p481) target = $region56
      $region55: #{tpu_custom_call.1} parent=5 // pred_region
        %s484 = ssub.s32 %s16, 2
        // Predicated region
        $region57: #{tpu_custom_call.1} parent=55 // pred_check
          %p485 = pneg %p197
        $region58: #{tpu_custom_call.1} parent=55 // pred_check_branch
          %487 = sbr.rel (%p485) target = $region60
        $region59: #{tpu_custom_call.1} parent=55 // pred_region
          %s488 = sand.u32 %s182, 1
          %s489 = scalar_lea.sflag [#allocation3], %s488
          %s490 = sand.u32 %s182, 1
          %s491 = smul.addr %s490, 8
          %s492 = scalar_lea.vmem [#allocation2], %s491
          %493 = dma.done %s489, 128
        $region60: #{tpu_custom_call.1} parent=55 // pred_fallthru
          _
      $region56: #{tpu_custom_call.1} parent=5 // pred_fallthru
        _
    $region6: #{tpu_custom_call.1} parent=1 // loop_footer
      %s20 = sadd.s32 1, %s16
    $region7: #{tpu_custom_call.1} parent=1 // loop_footer_branch
      %15 = sbr.rel target = $region3
    $region8: #{tpu_custom_call.1} parent=1 // loop_exit
      _
    %494 = vsyncpa [#allocation3], 1
    %s495 = scalar_lea.sflag [#allocation3], 1
    %496 = vsyncpa %s495, 1

</llo_original>
